<compile_context>
chip_gen: v7x
topology: tpu7x:2x2x1
jax: 0.10.0
libtpu: 0.0.40
codegen_flags: <defaults>
</compile_context>

<pallas_src>
import jax
import jax.numpy as jnp
from jax.experimental import pallas as pl
from jax.experimental.pallas import tpu as pltpu

N_INPUT = 13
N_HIDDEN = 32
N_OUT = 15

DEFAULT_BLOCK_B = 1024  # batch tile on the lane axis; multiple of 128.


def _round_up(x, m):
    return ((x + m - 1) // m) * m


def _sigmoid_f32(h):
    # exp and the approx reciprocal both issue on the EUP slot, keeping the
    # VALU slots free. Math done in f32 (v5e has no bf16 VPU/EUP).
    return pl.reciprocal(1.0 + jnp.exp(-h), approx=True)


def winenet_kernel(x_ref, w1_ref, b1_ref, w2_ref, b2_ref, w3_ref, b3_ref, o_ref):
    x = x_ref[...]                                                     # (13, BM) bf16
    h1 = jnp.dot(w1_ref[...], x, preferred_element_type=jnp.float32)   # (32, BM) f32
    h1 = _sigmoid_f32(h1 + b1_ref[...]).astype(jnp.bfloat16)
    h2 = jnp.dot(w2_ref[...], h1, preferred_element_type=jnp.float32)  # (32, BM) f32
    h2 = _sigmoid_f32(h2 + b2_ref[...]).astype(jnp.bfloat16)
    out = jnp.dot(w3_ref[...], h2, preferred_element_type=jnp.float32)  # (15, BM) f32
    o_ref[...] = (out + b3_ref[...]).astype(o_ref.dtype)


def winenet_forward(x, params, *, block_b=DEFAULT_BLOCK_B):
    """x: (B, N_INPUT) f32 -> logits (B, N_OUT) f32 (matches WineNet.forward)."""
    assert block_b % 128 == 0
    w1, b1, w2, b2, w3, b3 = params
    B = x.shape[0]

    bm = min(block_b, _round_up(max(B, 1), 128))  # lane-axis tile (multiple of 128)
    b_pad = _round_up(B, bm)                      # pad batch so grid tiles evenly
    grid = (pl.cdiv(b_pad, bm),)

    # Put batch on the lane axis, stream as bf16, zero-pad the batch tail.
    x_t = jnp.pad(x.T.astype(jnp.bfloat16), ((0, 0), (0, b_pad - B)))

    full = lambda i: (0, 0)   # grid-invariant block: stays resident in VMEM
    tile = lambda i: (0, i)   # batch-tiled along the lane axis

    out_t = pl.pallas_call(
        winenet_kernel,
        out_shape=jax.ShapeDtypeStruct((N_OUT, b_pad), jnp.float32),
        grid=grid,
        in_specs=[
            pl.BlockSpec((N_INPUT, bm), tile),         # x   (streamed, bf16)
            pl.BlockSpec((N_HIDDEN, N_INPUT), full),   # W1  (resident)
            pl.BlockSpec((N_HIDDEN, 1), full),         # b1
            pl.BlockSpec((N_HIDDEN, N_HIDDEN), full),  # W2
            pl.BlockSpec((N_HIDDEN, 1), full),         # b2
            pl.BlockSpec((N_OUT, N_HIDDEN), full),     # W3
            pl.BlockSpec((N_OUT, 1), full),            # b3
        ],
        out_specs=pl.BlockSpec((N_OUT, bm), tile),
        compiler_params=pltpu.CompilerParams(
            # Independent batch tiles -> megacore sharding on v7x (2 TCs);
            # harmless on v5e/v6e. VMEM use is ~200 KB at BM=1024, well under
            # v7x's 64 MiB, so no vmem_limit override needed.
            dimension_semantics=("parallel",),
        ),
    )(
        x_t,
        w1.astype(jnp.bfloat16), b1,
        w2.astype(jnp.bfloat16), b2,
        w3.astype(jnp.bfloat16), b3,
    )
    # Drop batch padding and return in the PyTorch (B, N_OUT) convention.
    return out_t[:, :B].T


def winenet_inference(x, params, *, block_b=DEFAULT_BLOCK_B):
    # inference() = forward() + softmax over dim=1 (cheap glue, left to XLA).
    return jax.nn.softmax(winenet_forward(x, params, block_b=block_b), axis=1)


def init_params(key):
    """PyTorch-style Linear init: W,b ~ U(-1/sqrt(fan_in), 1/sqrt(fan_in)).
    W stored (out, in) as in torch; b stored (out, 1)."""
    def linear(key, fan_in, fan_out):
        kw, kb = jax.random.split(key)
        bound = 1.0 / jnp.sqrt(float(fan_in))
        w = jax.random.uniform(kw, (fan_out, fan_in), jnp.float32, -bound, bound)
        b = jax.random.uniform(kb, (fan_out, 1), jnp.float32, -bound, bound)
        return w, b

    k1, k2, k3 = jax.random.split(key, 3)
    w1, b1 = linear(k1, N_INPUT, N_HIDDEN)
    w2, b2 = linear(k2, N_HIDDEN, N_HIDDEN)
    w3, b3 = linear(k3, N_HIDDEN, N_OUT)
    return (w1, b1, w2, b2, w3, b3)


def winenet_forward_ref(x, params):
    w1, b1, w2, b2, w3, b3 = params
    h1 = jax.nn.sigmoid(x @ w1.T + b1[:, 0])
    h2 = jax.nn.sigmoid(h1 @ w2.T + b2[:, 0])
    return h2 @ w3.T + b3[:, 0]


if __name__ == "__main__":
    key = jax.random.PRNGKey(0)
    kp, kx, kx2 = jax.random.split(key, 3)
    params = init_params(kp)

    # Small case (single grid step, batch padded 8 -> 128).
    B = 8
    x = jax.random.normal(kx, (B, N_INPUT), jnp.float32)
    logits = winenet_forward(x, params)
    jax.block_until_ready(logits)
    ref = winenet_forward_ref(x, params)
    assert logits.shape == (B, N_OUT)
    # bf16-streamed matmuls => loosen tolerance vs the pure-f32 reference.
    assert jnp.allclose(logits, ref, atol=2e-2, rtol=2e-2)

    # Non-multiple batch with a multi-step grid (exercises padding + tiling).
    B2 = 300
    x2 = jax.random.normal(kx2, (B2, N_INPUT), jnp.float32)
    logits2 = winenet_forward(x2, params, block_b=128)  # grid of 3 batch tiles
    jax.block_until_ready(logits2)
    ref2 = winenet_forward_ref(x2, params)
    assert logits2.shape == (B2, N_OUT)
    assert jnp.allclose(logits2, ref2, atol=2e-2, rtol=2e-2)

    probs = winenet_inference(x, params)
    jax.block_until_ready(probs)
    assert jnp.allclose(jnp.sum(probs, axis=1), 1.0, atol=1e-4)

    print("KERNEL_OK")
</pallas_src>

<mosaic_0001>
module attributes {stable_mosaic.version = 11 : i64} {
  func.func @winenet_kernel(%arg0: i32, %arg1: memref<13x128xbf16, #tpu.memory_space<vmem>>, %arg2: memref<32x13xbf16, #tpu.memory_space<vmem>>, %arg3: memref<32x1xf32, #tpu.memory_space<vmem>>, %arg4: memref<32x32xbf16, #tpu.memory_space<vmem>>, %arg5: memref<32x1xf32, #tpu.memory_space<vmem>>, %arg6: memref<15x32xbf16, #tpu.memory_space<vmem>>, %arg7: memref<15x1xf32, #tpu.memory_space<vmem>>, %arg8: memref<15x128xf32, #tpu.memory_space<vmem>>) attributes {dimension_semantics = [#tpu.dimension_semantics<parallel>], iteration_bounds = array<i64: 1>, scalar_prefetch = 0 : i64, scratch_operands = 0 : i64, tpu.core_type = #tpu.core_type<tc>, window_params = [{transform_indices = @transform_0, window_bounds = array<i64: 13, 128>}, {pipeline_mode = #tpu.pipeline_mode<synchronous>, transform_indices = @transform_1, window_bounds = array<i64: 32, 13>}, {pipeline_mode = #tpu.pipeline_mode<synchronous>, transform_indices = @transform_2, window_bounds = array<i64: 32, 1>}, {pipeline_mode = #tpu.pipeline_mode<synchronous>, transform_indices = @transform_3, window_bounds = array<i64: 32, 32>}, {pipeline_mode = #tpu.pipeline_mode<synchronous>, transform_indices = @transform_4, window_bounds = array<i64: 32, 1>}, {pipeline_mode = #tpu.pipeline_mode<synchronous>, transform_indices = @transform_5, window_bounds = array<i64: 15, 32>}, {pipeline_mode = #tpu.pipeline_mode<synchronous>, transform_indices = @transform_6, window_bounds = array<i64: 15, 1>}, {transform_indices = @transform_7, window_bounds = array<i64: 15, 128>}]} {
    %c0 = arith.constant 0 : index
    %c0_0 = arith.constant 0 : index
    %0 = vector.load %arg1[%c0, %c0_0] : memref<13x128xbf16, #tpu.memory_space<vmem>>, vector<13x128xbf16>
    %c0_1 = arith.constant 0 : index
    %c0_2 = arith.constant 0 : index
    %1 = vector.load %arg2[%c0_1, %c0_2] : memref<32x13xbf16, #tpu.memory_space<vmem>>, vector<32x13xbf16>
    %cst = arith.constant dense<0.000000e+00> : vector<32x128xf32>
    %2 = tpu.matmul %1, %0, %cst {dimension_numbers = #tpu.dot_dimension_numbers<[1], [0], [0], [1], [0, 0, 1, 1], [], []>} : vector<32x13xbf16>, vector<13x128xbf16>, vector<32x128xf32> -> vector<32x128xf32>
    %c0_3 = arith.constant 0 : index
    %c0_4 = arith.constant 0 : index
    %3 = vector.load %arg3[%c0_3, %c0_4] : memref<32x1xf32, #tpu.memory_space<vmem>>, vector<32x1xf32>
    %4 = vector.broadcast %3 : vector<32x1xf32> to vector<32x128xf32>
    %5 = arith.addf %2, %4 : vector<32x128xf32>
    %cst_5 = arith.constant 0.000000e+00 : f32
    %6 = vector.broadcast %cst_5 : f32 to vector<32x128xf32>
    %7 = arith.subf %6, %5 : vector<32x128xf32>
    %8 = math.exp %7 : vector<32x128xf32>
    %cst_6 = arith.constant 1.000000e+00 : f32
    %9 = vector.broadcast %cst_6 : f32 to vector<32x128xf32>
    %10 = arith.addf %9, %8 : vector<32x128xf32>
    %11 = tpu.reciprocal %10 {approx = true} : vector<32x128xf32> -> vector<32x128xf32>
    %12 = arith.truncf %11 : vector<32x128xf32> to vector<32x128xbf16>
    %c0_7 = arith.constant 0 : index
    %c0_8 = arith.constant 0 : index
    %13 = vector.load %arg4[%c0_7, %c0_8] : memref<32x32xbf16, #tpu.memory_space<vmem>>, vector<32x32xbf16>
    %cst_9 = arith.constant dense<0.000000e+00> : vector<32x128xf32>
    %14 = tpu.matmul %13, %12, %cst_9 {dimension_numbers = #tpu.dot_dimension_numbers<[1], [0], [0], [1], [0, 0, 1, 1], [], []>} : vector<32x32xbf16>, vector<32x128xbf16>, vector<32x128xf32> -> vector<32x128xf32>
    %c0_10 = arith.constant 0 : index
    %c0_11 = arith.constant 0 : index
    %15 = vector.load %arg5[%c0_10, %c0_11] : memref<32x1xf32, #tpu.memory_space<vmem>>, vector<32x1xf32>
    %16 = vector.broadcast %15 : vector<32x1xf32> to vector<32x128xf32>
    %17 = arith.addf %14, %16 : vector<32x128xf32>
    %cst_12 = arith.constant 0.000000e+00 : f32
    %18 = vector.broadcast %cst_12 : f32 to vector<32x128xf32>
    %19 = arith.subf %18, %17 : vector<32x128xf32>
    %20 = math.exp %19 : vector<32x128xf32>
    %cst_13 = arith.constant 1.000000e+00 : f32
    %21 = vector.broadcast %cst_13 : f32 to vector<32x128xf32>
    %22 = arith.addf %21, %20 : vector<32x128xf32>
    %23 = tpu.reciprocal %22 {approx = true} : vector<32x128xf32> -> vector<32x128xf32>
    %24 = arith.truncf %23 : vector<32x128xf32> to vector<32x128xbf16>
    %c0_14 = arith.constant 0 : index
    %c0_15 = arith.constant 0 : index
    %25 = vector.load %arg6[%c0_14, %c0_15] : memref<15x32xbf16, #tpu.memory_space<vmem>>, vector<15x32xbf16>
    %cst_16 = arith.constant dense<0.000000e+00> : vector<15x128xf32>
    %26 = tpu.matmul %25, %24, %cst_16 {dimension_numbers = #tpu.dot_dimension_numbers<[1], [0], [0], [1], [0, 0, 1, 1], [], []>} : vector<15x32xbf16>, vector<32x128xbf16>, vector<15x128xf32> -> vector<15x128xf32>
    %c0_17 = arith.constant 0 : index
    %c0_18 = arith.constant 0 : index
    %27 = vector.load %arg7[%c0_17, %c0_18] : memref<15x1xf32, #tpu.memory_space<vmem>>, vector<15x1xf32>
    %28 = vector.broadcast %27 : vector<15x1xf32> to vector<15x128xf32>
    %29 = arith.addf %26, %28 : vector<15x128xf32>
    %c0_19 = arith.constant 0 : index
    %c0_20 = arith.constant 0 : index
    %30 = vector.load %arg8[%c0_19, %c0_20] : memref<15x128xf32, #tpu.memory_space<vmem>>, vector<15x128xf32>
    tpu.vector_store %arg8[%c0_19, %c0_20], %29 {strides = array<i32>} : memref<15x128xf32, #tpu.memory_space<vmem>>, vector<15x128xf32>,
    return
  }
  func.func @transform_0(%arg0: i32) -> (i32, i32) {
    %c0_i32 = arith.constant 0 : i32
    %c0_i32_0 = arith.constant 0 : i32
    return %c0_i32, %arg0 : i32, i32
  }
  func.func @transform_1(%arg0: i32) -> (i32, i32) {
    %c0_i32 = arith.constant 0 : i32
    %c0_i32_0 = arith.constant 0 : i32
    %c0_i32_1 = arith.constant 0 : i32
    return %c0_i32, %c0_i32_0 : i32, i32
  }
  func.func @transform_2(%arg0: i32) -> (i32, i32) {
    %c0_i32 = arith.constant 0 : i32
    %c0_i32_0 = arith.constant 0 : i32
    %c0_i32_1 = arith.constant 0 : i32
    return %c0_i32, %c0_i32_0 : i32, i32
  }
  func.func @transform_3(%arg0: i32) -> (i32, i32) {
    %c0_i32 = arith.constant 0 : i32
    %c0_i32_0 = arith.constant 0 : i32
    %c0_i32_1 = arith.constant 0 : i32
    return %c0_i32, %c0_i32_0 : i32, i32
  }
  func.func @transform_4(%arg0: i32) -> (i32, i32) {
    %c0_i32 = arith.constant 0 : i32
    %c0_i32_0 = arith.constant 0 : i32
    %c0_i32_1 = arith.constant 0 : i32
    return %c0_i32, %c0_i32_0 : i32, i32
  }
  func.func @transform_5(%arg0: i32) -> (i32, i32) {
    %c0_i32 = arith.constant 0 : i32
    %c0_i32_0 = arith.constant 0 : i32
    %c0_i32_1 = arith.constant 0 : i32
    return %c0_i32, %c0_i32_0 : i32, i32
  }
  func.func @transform_6(%arg0: i32) -> (i32, i32) {
    %c0_i32 = arith.constant 0 : i32
    %c0_i32_0 = arith.constant 0 : i32
    %c0_i32_1 = arith.constant 0 : i32
    return %c0_i32, %c0_i32_0 : i32, i32
  }
  func.func @transform_7(%arg0: i32) -> (i32, i32) {
    %c0_i32 = arith.constant 0 : i32
    %c0_i32_0 = arith.constant 0 : i32
    return %c0_i32, %arg0 : i32, i32
  }
}

</mosaic_0001>

<llo_original>
// kernel: tpu_custom_call.1
$region0: #{tpu_custom_call.1}
  #allocation0 [shape = 'u32[]', space=smem, size = 0x4, offset = 0x4, fixed_abs, tag = 'smem constant byte address 0x4 - core index']
  #allocation1 [shape = 'u32[144,128]{1,0:T(1,128)}', space=vmem, size = 0x12000, scoped, tag = 'internal scratch']
  %s0 = inlined_call_operand.vmem [shape: bf16[13,128], index: 0, kind: input, shape index: {}]
  %s1 = inlined_call_operand.vmem [shape: bf16[32,13], index: 1, kind: input, shape index: {}]
  %s2 = inlined_call_operand.vmem [shape: f32[32,1], index: 2, kind: input, shape index: {}]
  %s3 = inlined_call_operand.vmem [shape: bf16[32,32], index: 3, kind: input, shape index: {}]
  %s4 = inlined_call_operand.vmem [shape: f32[32,1], index: 4, kind: input, shape index: {}]
  %s5 = inlined_call_operand.vmem [shape: bf16[15,32], index: 5, kind: input, shape index: {}]
  %s6 = inlined_call_operand.vmem [shape: f32[15,1], index: 6, kind: input, shape index: {}]
  %s7 = inlined_call_operand.hbm [shape: f32[15,128], index: 7, kind: output, shape index: {}]
  %s8 = sld [smem:[#allocation0]]
  $region38: #{tpu_custom_call.1} parent=0
    _
  %s10 = ssub.s32 1, %s8
  %s11 = scalar_select 0, %s10, %s8
  $region1: #{tpu_custom_call.1} parent=0
    #allocation2 [shape = 'u8[8192]{0}', space=vmem, size = 0x2000, scoped, tag = 'output window, operand 0, single buffered']
    #allocation3 [shape = 's32[1]{0}', space=sflag, size = 0x4, scoped, tag = 'scoped memory for tpu_custom_call.1']
    %12 = vsyncpa [#allocation3], 0
    // Predicated region
    $region2: #{tpu_custom_call.1} parent=1 // pred_check
      _
    $region3: #{tpu_custom_call.1} parent=1 // pred_check_branch
      %14 = sbr.rel (0) target = $region5
    $region4: #{tpu_custom_call.1} parent=1 // pred_region
      _
    $region5: #{tpu_custom_call.1} parent=1 // pred_fallthru
      _
    // Predicated region
    $region6: #{tpu_custom_call.1} parent=1 // pred_check
      _
    $region7: #{tpu_custom_call.1} parent=1 // pred_check_branch
      %16 = sbr.rel (0) target = $region9
    $region8: #{tpu_custom_call.1} parent=1 // pred_region
      _
    $region9: #{tpu_custom_call.1} parent=1 // pred_fallthru
      _
    // Predicated region
    $region10: #{tpu_custom_call.1} parent=1 // pred_check
      _
    $region11: #{tpu_custom_call.1} parent=1 // pred_check_branch
      %18 = sbr.rel (0) target = $region13
    $region12: #{tpu_custom_call.1} parent=1 // pred_region
      _
    $region13: #{tpu_custom_call.1} parent=1 // pred_fallthru
      _
    // Predicated region
    $region14: #{tpu_custom_call.1} parent=1 // pred_check
      _
    $region15: #{tpu_custom_call.1} parent=1 // pred_check_branch
      %20 = sbr.rel (0) target = $region17
    $region16: #{tpu_custom_call.1} parent=1 // pred_region
      _
    $region17: #{tpu_custom_call.1} parent=1 // pred_fallthru
      _
    // Predicated region
    $region18: #{tpu_custom_call.1} parent=1 // pred_check
      _
    $region19: #{tpu_custom_call.1} parent=1 // pred_check_branch
      %22 = sbr.rel (0) target = $region21
    $region20: #{tpu_custom_call.1} parent=1 // pred_region
      _
    $region21: #{tpu_custom_call.1} parent=1 // pred_fallthru
      _
    // Predicated region
    $region22: #{tpu_custom_call.1} parent=1 // pred_check
      _
    $region23: #{tpu_custom_call.1} parent=1 // pred_check_branch
      %24 = sbr.rel (0) target = $region25
    $region24: #{tpu_custom_call.1} parent=1 // pred_region
      _
    $region25: #{tpu_custom_call.1} parent=1 // pred_fallthru
      _
    // Predicated region
    $region26: #{tpu_custom_call.1} parent=1 // pred_check
      _
    $region27: #{tpu_custom_call.1} parent=1 // pred_check_branch
      %26 = sbr.rel (0) target = $region29
    $region28: #{tpu_custom_call.1} parent=1 // pred_region
      _
    $region29: #{tpu_custom_call.1} parent=1 // pred_fallthru
      _
    %v28 = vld [vmem:[%s0] sm:$0xf]
    %v29 = vld [vmem:[%s0 + $0x4] sm:$0x7]
    %v30 = vld [vmem:[%s1] sm:$0xf]
    %v31 = vld [vmem:[%s1 + $0x4] sm:$0xf]
    %v32 = vld [vmem:[%s1 + $0x8] sm:$0xf]
    %v33 = vld [vmem:[%s1 + $0xc] sm:$0xf]
    %v34 = vld [vmem:[%s2] sm:$0xff]
    %v35 = vld [vmem:[%s2 + $0x8] sm:$0xff]
    %v36 = vld [vmem:[%s2 + $0x10] sm:$0xff]
    %v37 = vld [vmem:[%s2 + $0x18] sm:$0xff]
    %39 = vset.pattern.permute.xlu0 0
    %40 = vperm.xlu0 %39, %v34
    %v41 = vpop.permute.xlu0 %40
    %44 = vset.pattern.permute.xlu0 0
    %45 = vperm.xlu0 %44, %v35
    %v46 = vpop.permute.xlu0 %45
    %49 = vset.pattern.permute.xlu0 0
    %50 = vperm.xlu0 %49, %v36
    %v51 = vpop.permute.xlu0 %50
    %54 = vset.pattern.permute.xlu0 0
    %55 = vperm.xlu0 %54, %v37
    %v56 = vpop.permute.xlu0 %55
    %v62 = vunpack.c.l.b16 %v30
    %v63 = vunpack.c.l.b16 %v31
    %v64 = vunpack.c.l.b16 %v32
    %v65 = vunpack.c.l.b16 %v33
    %v66 = vpack.c.b16 %v63, %v62
    %v67 = vpack.c.b16 %v65, %v64
    %v70 = vunpack.c.l.b16 %v28
    %v71 = vunpack.c.l.b16 %v29
    %v72 = vpack.c.b16 %v71, %v70
    %vm73 = vcmask 105472
    %v75 = vsel %vm73, %v66, 0
    %v78 = vsel %vm73, %v67, 0
    %vm80 = vcmask 1045504
    %vm81 = vcmask 1046528
    %v82 = vsel %vm80, 4294967295, 65535
    %v83 = vsel %vm81, %v82, 0
    %v85 = vand.u32 %v72, %v83
    %87 = vmatprep.subr.bf16.mxu0 0
    %88 = vmatpush1.bf16.msra.mxu0 %v85
    %89 = vmatprep.subr.bf16.mxu0 0
    %90 = vmatpush1.bf16.msra.mxu0 0
    %91 = vmatprep.subr.bf16.mxu0 0
    %92 = vmatpush1.bf16.msra.mxu0 0
    %93 = vmatprep.subr.bf16.mxu0 0
    %94 = vmatpush1.bf16.msra.mxu0 0
    %95 = vmatprep.subr.bf16.mxu0 0
    %96 = vmatpush1.bf16.msra.mxu0 0
    %97 = vmatprep.subr.bf16.mxu0 0
    %98 = vmatpush1.bf16.msra.mxu0 0
    %99 = vmatprep.subr.bf16.mxu0 0
    %100 = vmatpush1.bf16.msra.mxu0 0
    %101 = vmatprep.subr.bf16.mxu0 0
    %102 = vmatpush1.bf16.msra.mxu0 0
    %103 = vmatprep.subr.bf16.mxu0 0
    %104 = vmatpush1.bf16.msra.mxu0 0
    %105 = vmatprep.subr.bf16.mxu0 0
    %106 = vmatpush1.bf16.msra.mxu0 0
    %107 = vmatprep.subr.bf16.mxu0 0
    %108 = vmatpush1.bf16.msra.mxu0 0
    %109 = vmatprep.subr.bf16.mxu0 0
    %110 = vmatpush1.bf16.msra.mxu0 0
    %111 = vmatprep.subr.bf16.mxu0 0
    %112 = vmatpush1.bf16.msra.mxu0 0
    %113 = vmatprep.subr.bf16.mxu0 0
    %114 = vmatpush1.bf16.msra.mxu0 0
    %115 = vmatprep.subr.bf16.mxu0 0
    %116 = vmatpush1.bf16.msra.mxu0 0
    %117 = vmatprep.subr.bf16.mxu0 0
    %118 = vmatpush1.bf16.msra.mxu0 0
    %119 = vmatprep.mubr.bf16.mxu0 0
    %120 = vmatmul.mubr.bf16.gmra.mrb[0].mxu0 %v75
    %v121 = vpop.f32.mrb[0].mxu0
    %v122 = vadd.f32 %v41, %v121
    %v123 = vpop.f32.mrb[0].mxu0
    %v124 = vpop.f32.mrb[0].mxu0
    %v125 = vadd.f32 %v46, %v124
    %v126 = vpop.f32.mrb[0].mxu0
    %127 = vmatprep.mubr.bf16.mxu0 0
    %128 = vmatmul.mubr.bf16.gmra.mrb[0].mxu0 %v78
    %v129 = vpop.f32.mrb[0].mxu0
    %v130 = vadd.f32 %v51, %v129
    %v131 = vpop.f32.mrb[0].mxu0
    %v132 = vpop.f32.mrb[0].mxu0
    %v133 = vadd.f32 %v56, %v132
    %v134 = vpop.f32.mrb[0].mxu0
    %135 = vdwg.mxu0
    %v136 = vsub.f32 0.0, %v122
    %v137 = vsub.f32 0.0, %v125
    %v138 = vsub.f32 0.0, %v130
    %v139 = vsub.f32 0.0, %v133
    %v140 = vmul.f32 %v136, 1.442695
    %v141 = vpow.pop %v140
    %v142 = vmul.f32 %v137, 1.442695
    %v143 = vpow.pop %v142
    %v144 = vmul.f32 %v138, 1.442695
    %v145 = vpow.pop %v144
    %v146 = vmul.f32 %v139, 1.442695
    %v147 = vpow.pop %v146
    %v148 = vadd.f32 %v141, 1.0
    %v149 = vadd.f32 %v143, 1.0
    %v150 = vadd.f32 %v145, 1.0
    %v151 = vadd.f32 %v147, 1.0
    %v152 = vrcp.pop %v148
    %v153 = vrcp.pop %v149
    %v154 = vrcp.pop %v150
    %v155 = vrcp.pop %v151
    %v156 = vpack.c.bf16 %v153, %v152
    %v157 = vpack.c.bf16 %v155, %v154
    %v158 = vld [vmem:[%s3] sm:$0xf]
    %v159 = vld [vmem:[%s3 + $0x4] sm:$0xf]
    %v160 = vld [vmem:[%s3 + $0x8] sm:$0xf]
    %v161 = vld [vmem:[%s3 + $0xc] sm:$0xf]
    %v162 = vld [vmem:[%s4] sm:$0xff]
    %v163 = vld [vmem:[%s4 + $0x8] sm:$0xff]
    %v164 = vld [vmem:[%s4 + $0x10] sm:$0xff]
    %v165 = vld [vmem:[%s4 + $0x18] sm:$0xff]
    %167 = vset.pattern.permute.xlu0 0
    %168 = vperm.xlu0 %167, %v162
    %v169 = vpop.permute.xlu0 %168
    %172 = vset.pattern.permute.xlu0 0
    %173 = vperm.xlu0 %172, %v163
    %v174 = vpop.permute.xlu0 %173
    %177 = vset.pattern.permute.xlu0 0
    %178 = vperm.xlu0 %177, %v164
    %v179 = vpop.permute.xlu0 %178
    %182 = vset.pattern.permute.xlu0 0
    %183 = vperm.xlu0 %182, %v165
    %v184 = vpop.permute.xlu0 %183
    %v190 = vunpack.c.l.b16 %v158
    %v191 = vunpack.c.l.b16 %v159
    %v192 = vunpack.c.l.b16 %v160
    %v193 = vunpack.c.l.b16 %v161
    %v194 = vpack.c.b16 %v191, %v190
    %v195 = vpack.c.b16 %v193, %v192
    %vm196 = vcmask 261120
    %v198 = vsel %vm196, %v194, 0
    %v201 = vsel %vm196, %v195, 0
    %203 = vmatprep.subr.bf16.mxu0 0
    %204 = vmatpush1.bf16.msra.mxu0 %v156
    %205 = vmatprep.subr.bf16.mxu0 0
    %206 = vmatpush1.bf16.msra.mxu0 %v157
    %207 = vmatprep.subr.bf16.mxu0 0
    %208 = vmatpush1.bf16.msra.mxu0 0
    %209 = vmatprep.subr.bf16.mxu0 0
    %210 = vmatpush1.bf16.msra.mxu0 0
    %211 = vmatprep.subr.bf16.mxu0 0
    %212 = vmatpush1.bf16.msra.mxu0 0
    %213 = vmatprep.subr.bf16.mxu0 0
    %214 = vmatpush1.bf16.msra.mxu0 0
    %215 = vmatprep.subr.bf16.mxu0 0
    %216 = vmatpush1.bf16.msra.mxu0 0
    %217 = vmatprep.subr.bf16.mxu0 0
    %218 = vmatpush1.bf16.msra.mxu0 0
    %219 = vmatprep.subr.bf16.mxu0 0
    %220 = vmatpush1.bf16.msra.mxu0 0
    %221 = vmatprep.subr.bf16.mxu0 0
    %222 = vmatpush1.bf16.msra.mxu0 0
    %223 = vmatprep.subr.bf16.mxu0 0
    %224 = vmatpush1.bf16.msra.mxu0 0
    %225 = vmatprep.subr.bf16.mxu0 0
    %226 = vmatpush1.bf16.msra.mxu0 0
    %227 = vmatprep.subr.bf16.mxu0 0
    %228 = vmatpush1.bf16.msra.mxu0 0
    %229 = vmatprep.subr.bf16.mxu0 0
    %230 = vmatpush1.bf16.msra.mxu0 0
    %231 = vmatprep.subr.bf16.mxu0 0
    %232 = vmatpush1.bf16.msra.mxu0 0
    %233 = vmatprep.subr.bf16.mxu0 0
    %234 = vmatpush1.bf16.msra.mxu0 0
    %235 = vmatprep.mubr.bf16.mxu0 0
    %236 = vmatmul.mubr.bf16.gmra.mrb[0].mxu0 %v198
    %v237 = vpop.f32.mrb[0].mxu0
    %v238 = vadd.f32 %v169, %v237
    %v239 = vpop.f32.mrb[0].mxu0
    %v240 = vpop.f32.mrb[0].mxu0
    %v241 = vadd.f32 %v174, %v240
    %v242 = vpop.f32.mrb[0].mxu0
    %243 = vmatprep.mubr.bf16.mxu0 0
    %244 = vmatmul.mubr.bf16.gmra.mrb[0].mxu0 %v201
    %v245 = vpop.f32.mrb[0].mxu0
    %v246 = vadd.f32 %v179, %v245
    %v247 = vpop.f32.mrb[0].mxu0
    %v248 = vpop.f32.mrb[0].mxu0
    %v249 = vadd.f32 %v184, %v248
    %v250 = vpop.f32.mrb[0].mxu0
    %251 = vdwg.mxu0
    %v252 = vsub.f32 0.0, %v238
    %v253 = vsub.f32 0.0, %v241
    %v254 = vsub.f32 0.0, %v246
    %v255 = vsub.f32 0.0, %v249
    %v256 = vmul.f32 %v252, 1.442695
    %v257 = vpow.pop %v256
    %v258 = vmul.f32 %v253, 1.442695
    %v259 = vpow.pop %v258
    %v260 = vmul.f32 %v254, 1.442695
    %v261 = vpow.pop %v260
    %v262 = vmul.f32 %v255, 1.442695
    %v263 = vpow.pop %v262
    %v264 = vadd.f32 %v257, 1.0
    %v265 = vadd.f32 %v259, 1.0
    %v266 = vadd.f32 %v261, 1.0
    %v267 = vadd.f32 %v263, 1.0
    %v268 = vrcp.pop %v264
    %v269 = vrcp.pop %v265
    %v270 = vrcp.pop %v266
    %v271 = vrcp.pop %v267
    %v272 = vpack.c.bf16 %v269, %v268
    %v273 = vpack.c.bf16 %v271, %v270
    %v274 = vld [vmem:[%s5] sm:$0xf]
    %v275 = vld [vmem:[%s5 + $0x4] sm:$0xf]
    %v276 = vld [vmem:[%s6] sm:$0xff]
    %v277 = vld [vmem:[%s6 + $0x8] sm:$0x7f]
    %279 = vset.pattern.permute.xlu0 0
    %280 = vperm.xlu0 %279, %v276
    %v281 = vpop.permute.xlu0 %280
    %284 = vset.pattern.permute.xlu0 0
    %285 = vperm.xlu0 %284, %v277
    %v286 = vpop.permute.xlu0 %285
    %v290 = vunpack.c.l.b16 %v274
    %v291 = vunpack.c.l.b16 %v275
    %v292 = vpack.c.b16 %v291, %v290
    %v294 = vsel %vm196, %v292, 0
    %296 = vmatprep.subr.bf16.mxu0 0
    %297 = vmatpush1.bf16.msra.mxu0 %v272
    %298 = vmatprep.subr.bf16.mxu0 0
    %299 = vmatpush1.bf16.msra.mxu0 %v273
    %300 = vmatprep.subr.bf16.mxu0 0
    %301 = vmatpush1.bf16.msra.mxu0 0
    %302 = vmatprep.subr.bf16.mxu0 0
    %303 = vmatpush1.bf16.msra.mxu0 0
    %304 = vmatprep.subr.bf16.mxu0 0
    %305 = vmatpush1.bf16.msra.mxu0 0
    %306 = vmatprep.subr.bf16.mxu0 0
    %307 = vmatpush1.bf16.msra.mxu0 0
    %308 = vmatprep.subr.bf16.mxu0 0
    %309 = vmatpush1.bf16.msra.mxu0 0
    %310 = vmatprep.subr.bf16.mxu0 0
    %311 = vmatpush1.bf16.msra.mxu0 0
    %312 = vmatprep.subr.bf16.mxu0 0
    %313 = vmatpush1.bf16.msra.mxu0 0
    %314 = vmatprep.subr.bf16.mxu0 0
    %315 = vmatpush1.bf16.msra.mxu0 0
    %316 = vmatprep.subr.bf16.mxu0 0
    %317 = vmatpush1.bf16.msra.mxu0 0
    %318 = vmatprep.subr.bf16.mxu0 0
    %319 = vmatpush1.bf16.msra.mxu0 0
    %320 = vmatprep.subr.bf16.mxu0 0
    %321 = vmatpush1.bf16.msra.mxu0 0
    %322 = vmatprep.subr.bf16.mxu0 0
    %323 = vmatpush1.bf16.msra.mxu0 0
    %324 = vmatprep.subr.bf16.mxu0 0
    %325 = vmatpush1.bf16.msra.mxu0 0
    %326 = vmatprep.subr.bf16.mxu0 0
    %327 = vmatpush1.bf16.msra.mxu0 0
    %328 = vmatprep.mubr.bf16.mxu0 0
    %329 = vmatmul.mubr.bf16.gmra.mrb[0].mxu0 %v294
    %v330 = vpop.f32.mrb[0].mxu0
    %v331 = vadd.f32 %v281, %v330
    %v332 = vpop.f32.mrb[0].mxu0
    %v333 = vpop.f32.mrb[0].mxu0
    %v334 = vadd.f32 %v286, %v333
    %v335 = vpop.f32.mrb[0].mxu0
    %336 = vdwg.mxu0
    %337 = vst [vmem:[#allocation2] sm:$0xff] %v331
    %338 = vst [vmem:[#allocation2 + $0x8] sm:$0x7f] %v334
    // Predicated region
    $region30: #{tpu_custom_call.1} parent=1 // pred_check
      _
    $region31: #{tpu_custom_call.1} parent=1 // pred_check_branch
      %340 = sbr.rel (0) target = $region33
    $region32: #{tpu_custom_call.1} parent=1 // pred_region
      %s342 = ssub.s32 256, 256
      %343 = vsyncadd [#allocation3], %s342
      %s344 = sshll.u32 [#allocation2], 4
      %s345 = int_to_ptr.vmem [resolvable:$true] %s344
      %350 = dma.vmem_to_hbm [thread:$0]  %s345, 256, %s7, [#allocation3], 128, 128, 8
    $region33: #{tpu_custom_call.1} parent=1 // pred_fallthru
      _
    // Predicated region
    $region34: #{tpu_custom_call.1} parent=1 // pred_check
      _
    $region35: #{tpu_custom_call.1} parent=1 // pred_check_branch
      %352 = sbr.rel (0) target = $region37
    $region36: #{tpu_custom_call.1} parent=1 // pred_region
      %353 = dma.done [#allocation3], 256
    $region37: #{tpu_custom_call.1} parent=1 // pred_fallthru
      _
    %354 = vsyncpa [#allocation3], 1

</llo_original>
